<compile_context>
chip_gen: v5e
topology: v5e:2x2
jax: 0.10.0
libtpu: 0.0.40
codegen_flags: <defaults>
</compile_context>

<pallas_src>
import jax
import jax.numpy as jnp
from jax.experimental import pallas as pl
from jax.experimental.pallas import tpu as pltpu


def _nl_kernel(cita_ref, c_ref, u_ref, z_ref):
    # 2 vld + 3 VALU + 1 vst per output vreg: no VLIW slot comes close to
    # saturating, so HBM DMA is the only roofline.
    cita = cita_ref[0, 0]
    z_ref[...] = jnp.maximum(c_ref[...] - u_ref[...] - cita, 0.0)


def _choose_lanes(total):
    """Minor ("lane") extent of the 2D view of the flat tensor.

    A multiple of 128 gives unmasked stores and contiguous block DMA; wider
    lanes buy nothing once block bytes are fixed, so use exactly 128 when the
    flat size divides by 128.  Otherwise use the largest divisor <= 1024 so
    the 2D view is still free (no padding / copies); the block's last dim is
    then the full array extent, which Pallas accepts at any width.
    """
    if total % 128 == 0:
        return 128
    for d in range(min(total, 1024), 0, -1):
        if total % d == 0:
            return d
    return 1


def _choose_tile_rows(rows, lanes, itemsize, target_block_bytes):
    """Rows per block: as large as the VMEM budget allows, but with >= 2 grid
    steps whenever the slab is big enough so the "parallel" axis can be
    sharded across v7x's two TensorCores."""
    sublane = max(8, 32 // itemsize)                  # 8 f32 / 16 bf16 / 32 i8
    padded_lanes = ((lanes + 127) // 128) * 128       # VMEM lane padding
    bytes_per_row = padded_lanes * itemsize
    # Keep the double-buffered pipeline footprint (3 operands x 2 buffers)
    # comfortably below the scoped-VMEM limit requested below.
    block_bytes = min(target_block_bytes, (40 << 20) // 6)
    tile_rows = max(sublane, (block_bytes // bytes_per_row) // sublane * sublane)
    if tile_rows >= rows:
        if rows >= 2 * sublane:
            # Split into exactly two blocks (second may be ragged -> masked).
            tile_rows = ((rows + 2 * sublane - 1) // (2 * sublane)) * sublane
        else:
            tile_rows = rows                          # tiny slab: one full block
    return tile_rows


def nl_layer(c, u, cita, *, target_block_bytes=4 << 20):
    """Pallas TPU implementation of NlLayer.forward: z = relu(c - u - cita)."""
    assert c.shape == u.shape, "c and u must have the same shape"
    assert c.dtype == u.dtype, "c and u must have the same dtype"
    orig_shape = c.shape
    dtype = c.dtype
    itemsize = jnp.dtype(dtype).itemsize
    total = c.size

    lanes = _choose_lanes(total)
    rows = total // lanes
    tile_rows = _choose_tile_rows(rows, lanes, itemsize, target_block_bytes)
    grid = (pl.cdiv(rows, tile_rows),)

    # Zero-copy 2D views (reshape of contiguous flat tensors).
    c2 = c.reshape(rows, lanes)
    u2 = u.reshape(rows, lanes)
    cita_smem = jnp.asarray(cita, dtype=dtype).reshape(1, 1)

    padded_lanes = ((lanes + 127) // 128) * 128
    block_vmem = tile_rows * padded_lanes * itemsize
    # 3 operands x 2 pipeline buffers + headroom.  >= 32 MiB covers v5e's
    # 16 MiB default scoped-VMEM limit; the 48 MiB cap stays inside v7x's
    # 64 MiB physical VMEM (v5e/v6e have 128 MiB).
    vmem_limit = int(min(max(6 * block_vmem + (4 << 20), 32 << 20), 48 << 20))

    z2 = pl.pallas_call(
        _nl_kernel,
        out_shape=jax.ShapeDtypeStruct((rows, lanes), dtype),
        grid_spec=pltpu.PrefetchScalarGridSpec(
            num_scalar_prefetch=0,
            grid=grid,
            in_specs=[
                pl.BlockSpec(memory_space=pltpu.MemorySpace.SMEM),      # cita
                pl.BlockSpec((tile_rows, lanes), lambda i: (i, 0)),     # c tile
                pl.BlockSpec((tile_rows, lanes), lambda i: (i, 0)),     # u tile
            ],
            out_specs=pl.BlockSpec((tile_rows, lanes), lambda i: (i, 0)),
        ),
        compiler_params=pltpu.CompilerParams(
            dimension_semantics=("parallel",),   # shardable across v7x's 2 TCs
            vmem_limit_bytes=vmem_limit,
        ),
        cost_estimate=pl.CostEstimate(
            flops=3 * total,
            transcendentals=0,
            bytes_accessed=3 * total * itemsize,
        ),
    )(cita_smem, c2, u2)

    return z2.reshape(orig_shape)


if __name__ == "__main__":
    key = jax.random.PRNGKey(0)

    # Parameter from NlLayer.__init__: cita initialized to 0.0 (deterministic).
    cita = jnp.float32(0.0)

    # Case 1: small NCHW feature map; flat size is a multiple of 128
    # -> lanes=128, rows=16, two "parallel" grid steps.
    kc, ku, key = jax.random.split(key, 3)
    c1 = jax.random.normal(kc, (2, 4, 16, 16), dtype=jnp.float32)
    u1 = jax.random.normal(ku, (2, 4, 16, 16), dtype=jnp.float32)
    z1 = nl_layer(c1, u1, cita)
    jax.block_until_ready(z1)
    ref1 = jnp.maximum(c1 - u1 - cita, 0.0)
    assert z1.shape == c1.shape
    assert jnp.allclose(z1, ref1, atol=1e-6), "mismatch vs reference (case 1)"

    # Case 2: awkward shape (flat size 1155, not a multiple of 128) with a
    # nonzero cita -> zero-copy (3, 385) view, single full-extent block,
    # no pad / slice-back copies.
    cita2 = jnp.float32(0.25)
    kc2, ku2, key = jax.random.split(key, 3)
    c2 = jax.random.normal(kc2, (3, 5, 7, 11), dtype=jnp.float32)
    u2 = jax.random.normal(ku2, (3, 5, 7, 11), dtype=jnp.float32)
    z2 = nl_layer(c2, u2, cita2)
    jax.block_until_ready(z2)
    ref2 = jnp.maximum(c2 - u2 - cita2, 0.0)
    assert z2.shape == c2.shape
    assert jnp.allclose(z2, ref2, atol=1e-6), "mismatch vs reference (case 2)"

    # Case 3: moderate aligned slab exercising the byte-budgeted multi-step
    # grid (rows=2048 -> two 1024-row blocks).
    cita3 = jnp.float32(-0.1)
    kc3, ku3, key = jax.random.split(key, 3)
    c3 = jax.random.normal(kc3, (4, 8, 64, 128), dtype=jnp.float32)
    u3 = jax.random.normal(ku3, (4, 8, 64, 128), dtype=jnp.float32)
    z3 = nl_layer(c3, u3, cita3)
    jax.block_until_ready(z3)
    ref3 = jnp.maximum(c3 - u3 - cita3, 0.0)
    assert z3.shape == c3.shape
    assert jnp.allclose(z3, ref3, atol=1e-6), "mismatch vs reference (case 3)"

    print("KERNEL_OK")
</pallas_src>

<mosaic_0001>
module attributes {stable_mosaic.version = 11 : i64} {
  func.func @_nl_kernel(%arg0: i32, %arg1: memref<1x1xf32, #tpu.memory_space<smem>>, %arg2: memref<8x128xf32, #tpu.memory_space<vmem>>, %arg3: memref<8x128xf32, #tpu.memory_space<vmem>>, %arg4: memref<8x128xf32, #tpu.memory_space<vmem>>) attributes {dimension_semantics = [#tpu.dimension_semantics<parallel>], iteration_bounds = array<i64: 2>, scalar_prefetch = 0 : i64, scratch_operands = 0 : i64, tpu.core_type = #tpu.core_type<tc>, window_params = [{transform_indices = @transform_0, window_bounds = array<i64: 1, 1>}, {transform_indices = @transform_1, window_bounds = array<i64: 8, 128>}, {transform_indices = @transform_2, window_bounds = array<i64: 8, 128>}, {transform_indices = @transform_3, window_bounds = array<i64: 8, 128>}]} {
    %c0 = arith.constant 0 : index
    %c0_0 = arith.constant 0 : index
    %0 = memref.load %arg1[%c0, %c0_0] : memref<1x1xf32, #tpu.memory_space<smem>>
    %c0_1 = arith.constant 0 : index
    %c0_2 = arith.constant 0 : index
    %1 = vector.load %arg2[%c0_1, %c0_2] : memref<8x128xf32, #tpu.memory_space<vmem>>, vector<8x128xf32>
    %c0_3 = arith.constant 0 : index
    %c0_4 = arith.constant 0 : index
    %2 = vector.load %arg3[%c0_3, %c0_4] : memref<8x128xf32, #tpu.memory_space<vmem>>, vector<8x128xf32>
    %3 = arith.subf %1, %2 : vector<8x128xf32>
    %4 = vector.broadcast %0 : f32 to vector<8x128xf32>
    %5 = arith.subf %3, %4 : vector<8x128xf32>
    %cst = arith.constant 0.000000e+00 : f32
    %6 = vector.broadcast %cst : f32 to vector<8x128xf32>
    %7 = arith.maximumf %5, %6 : vector<8x128xf32>
    %c0_5 = arith.constant 0 : index
    %c0_6 = arith.constant 0 : index
    %8 = vector.load %arg4[%c0_5, %c0_6] : memref<8x128xf32, #tpu.memory_space<vmem>>, vector<8x128xf32>
    tpu.vector_store %arg4[%c0_5, %c0_6], %7 {strides = array<i32>} : memref<8x128xf32, #tpu.memory_space<vmem>>, vector<8x128xf32>,
    return
  }
  func.func @transform_0(%arg0: i32) -> (i32, i32) {
    %c0_i32 = arith.constant 0 : i32
    %c0_i32_0 = arith.constant 0 : i32
    %c0_i32_1 = arith.constant 0 : i32
    return %c0_i32, %c0_i32_0 : i32, i32
  }
  func.func @transform_1(%arg0: i32) -> (i32, i32) {
    %c0_i32 = arith.constant 0 : i32
    %c0_i32_0 = arith.constant 0 : i32
    return %arg0, %c0_i32 : i32, i32
  }
  func.func @transform_2(%arg0: i32) -> (i32, i32) {
    %c0_i32 = arith.constant 0 : i32
    %c0_i32_0 = arith.constant 0 : i32
    return %arg0, %c0_i32 : i32, i32
  }
  func.func @transform_3(%arg0: i32) -> (i32, i32) {
    %c0_i32 = arith.constant 0 : i32
    %c0_i32_0 = arith.constant 0 : i32
    return %arg0, %c0_i32 : i32, i32
  }
}

</mosaic_0001>

<llo_original>
// kernel: tpu_custom_call.1
$region0: #{tpu_custom_call.1}
  #allocation0 [shape = 'u32[]', space=smem, size = 0x4, offset = 0x4, fixed_abs, tag = 'smem constant byte address 0x4 - core index']
  #allocation1 [shape = 'u32[72,128]{1,0:T(1,128)}', space=vmem, size = 0x9000, scoped, tag = 'internal scratch']
  #allocation2 [shape = 'f32[1,1]{1,0:T(1,128)S(6)}', space=smem, size = 0x200, scoped, tag = 'scoped memory for tpu_custom_call.1']
  %s0 = inlined_call_operand.<no memory space> [shape: f32[1,1], index: 0, kind: input, shape index: {}]
  %s1 = inlined_call_operand.hbm [shape: f32[16,128], index: 1, kind: input, shape index: {}]
  %s2 = inlined_call_operand.hbm [shape: f32[16,128], index: 2, kind: input, shape index: {}]
  %s3 = inlined_call_operand.hbm [shape: f32[16,128], index: 3, kind: output, shape index: {}]
  %s4 = sld [smem:[#allocation0]]
  $region53: #{tpu_custom_call.1} parent=0
    _
  %s6 = ssub.s32 1, %s4
  %s7 = scalar_select 0, %s6, %s4
  %8 = sst [smem:[#allocation2]] %s0
  $region1: #{tpu_custom_call.1} parent=0
    #allocation3 [shape = 'u8[8192]{0}', space=vmem, size = 0x2000, scoped, tag = 'input window, operand 1']
    #allocation4 [shape = 's32[2]{0}', space=sflag, size = 0x8, scoped, tag = 'scoped memory for tpu_custom_call.1']
    #allocation5 [shape = 's32[2]{0}', space=sflag, size = 0x8, scoped, tag = 'scoped memory for tpu_custom_call.1']
    #allocation6 [shape = 'u8[8192]{0}', space=vmem, size = 0x2000, scoped, tag = 'input window, operand 2']
    #allocation7 [shape = 's32[2]{0}', space=sflag, size = 0x8, scoped, tag = 'scoped memory for tpu_custom_call.1']
    #allocation8 [shape = 'u8[8192]{0}', space=vmem, size = 0x2000, scoped, tag = 'output window, operand 0']
    %9 = vsyncpa [#allocation4], 0
    %s10 = scalar_lea.sflag [#allocation4], 1
    %11 = vsyncpa %s10, 0
    %12 = vsyncpa [#allocation7], 0
    %s13 = scalar_lea.sflag [#allocation7], 1
    %14 = vsyncpa %s13, 0
    %15 = vsyncpa [#allocation5], 0
    %s16 = scalar_lea.sflag [#allocation5], 1
    %17 = vsyncpa %s16, 0
    loop: start=0, step=1, limit=4
    $region2: #{tpu_custom_call.1} parent=1 // loop_pre_header
      _
    $region3: #{tpu_custom_call.1} parent=1 // loop_header
      %s19 = sphi 0, %s23
      %p20 = scmp.ge.s32.totalorder %s19, 4
      %s27 = sphi 0, %s27
      %s29 = sphi 0, %s27
      %s30 = sphi 0, %s29
      %s44 = sphi 0, %s30
      %s50 = sphi 0, %s52
      %s53 = sphi 0, %s50
      %s54 = sphi 0, %s53
      %s70 = sphi 0, %s54
      %s76 = sphi 0, %s78
      %s79 = sphi 0, %s76
      %s80 = sphi 0, %s79
      %s96 = sphi 0, %s80
      %s102 = sphi 0, %s104
      %s105 = sphi 0, %s102
      %s106 = sphi 0, %s105
      %s122 = sphi 0, %s106
    $region4: #{tpu_custom_call.1} parent=1 // loop_header_branch
      %22 = sbr.rel (%p20) target = $region8
    $region5: #{tpu_custom_call.1} parent=1 // loop_body
      %s24 = ssub.s32 %s19, 1
      %s25 = ssub.s32 %s19, 2
      %s26 = sadd.s32 %s19, 1
      %s28 = sadd.s32 %s27, 1
      %p31 = scmp.eq.s32.totalorder %s19, 1
      %p32 = scmp.ne.s32.totalorder %s27, %s29
      %p33 = scmp.eq.s32.totalorder %s19, 0
      %p34 = por %p32, %p33
      %p35 = scmp.ne.s32.totalorder %s27, %s29
      %p36 = scmp.eq.s32.totalorder %s24, 1
      %p37 = por %p35, %p36
      %p38 = scmp.ne.s32.totalorder %s29, %s30
      %p39 = scmp.eq.s32.totalorder %s24, 0
      %p40 = por %p38, %p39
      %p41 = scmp.ne.s32.totalorder %s29, %s30
      %p42 = scmp.eq.s32.totalorder %s25, 1
      %p43 = por %p41, %p42
      %p45 = scmp.ne.s32.totalorder %s30, %s44
      %p46 = scmp.eq.s32.totalorder %s25, 0
      %p47 = por %p45, %p46
      %s48 = ssub.s32 %s19, %s26
      %p49 = scmp.eq.s32.totalorder %s48, 0
      %s51 = sadd.s32 %s50, 1
      %s52 = scalar_select %p49, %s50, %s51
      %p55 = pneg %p49
      %p56 = scmp.eq.s32.totalorder %s19, 1
      %p57 = por %p55, %p56
      %p58 = scmp.ne.s32.totalorder %s50, %s53
      %p59 = scmp.eq.s32.totalorder %s19, 0
      %p60 = por %p58, %p59
      %p61 = scmp.ne.s32.totalorder %s50, %s53
      %p62 = scmp.eq.s32.totalorder %s24, 1
      %p63 = por %p61, %p62
      %p64 = scmp.ne.s32.totalorder %s53, %s54
      %p65 = scmp.eq.s32.totalorder %s24, 0
      %p66 = por %p64, %p65
      %p67 = scmp.ne.s32.totalorder %s53, %s54
      %p68 = scmp.eq.s32.totalorder %s25, 1
      %p69 = por %p67, %p68
      %p71 = scmp.ne.s32.totalorder %s54, %s70
      %p72 = scmp.eq.s32.totalorder %s25, 0
      %p73 = por %p71, %p72
      %s74 = ssub.s32 %s19, %s26
      %p75 = scmp.eq.s32.totalorder %s74, 0
      %s77 = sadd.s32 %s76, 1
      %s78 = scalar_select %p75, %s76, %s77
      %p81 = pneg %p75
      %p82 = scmp.eq.s32.totalorder %s19, 1
      %p83 = por %p81, %p82
      %p84 = scmp.ne.s32.totalorder %s76, %s79
      %p85 = scmp.eq.s32.totalorder %s19, 0
      %p86 = por %p84, %p85
      %p87 = scmp.ne.s32.totalorder %s76, %s79
      %p88 = scmp.eq.s32.totalorder %s24, 1
      %p89 = por %p87, %p88
      %p90 = scmp.ne.s32.totalorder %s79, %s80
      %p91 = scmp.eq.s32.totalorder %s24, 0
      %p92 = por %p90, %p91
      %p93 = scmp.ne.s32.totalorder %s79, %s80
      %p94 = scmp.eq.s32.totalorder %s25, 1
      %p95 = por %p93, %p94
      %p97 = scmp.ne.s32.totalorder %s80, %s96
      %p98 = scmp.eq.s32.totalorder %s25, 0
      %p99 = por %p97, %p98
      %s100 = ssub.s32 %s19, %s26
      %p101 = scmp.eq.s32.totalorder %s100, 0
      %s103 = sadd.s32 %s102, 1
      %s104 = scalar_select %p101, %s102, %s103
      %p107 = pneg %p101
      %p108 = scmp.eq.s32.totalorder %s19, 1
      %p109 = por %p107, %p108
      %p110 = scmp.ne.s32.totalorder %s102, %s105
      %p111 = scmp.eq.s32.totalorder %s19, 0
      %p112 = por %p110, %p111
      %p113 = scmp.ne.s32.totalorder %s102, %s105
      %p114 = scmp.eq.s32.totalorder %s24, 1
      %p115 = por %p113, %p114
      %p116 = scmp.ne.s32.totalorder %s105, %s106
      %p117 = scmp.eq.s32.totalorder %s24, 0
      %p118 = por %p116, %p117
      %p119 = scmp.ne.s32.totalorder %s105, %s106
      %p120 = scmp.eq.s32.totalorder %s25, 1
      %p121 = por %p119, %p120
      %p123 = scmp.ne.s32.totalorder %s106, %s122
      %p124 = scmp.eq.s32.totalorder %s25, 0
      %p125 = por %p123, %p124
      %p126 = scmp.le.s32.totalorder 1, %s19
      %p127 = scmp.lt.s32.totalorder %s19, 3
      %p128 = pnand %p126, %p127
      %p129 = pneg %p128
      // Predicated region
      $region9: #{tpu_custom_call.1} parent=5 // pred_check
        _
      $region10: #{tpu_custom_call.1} parent=5 // pred_check_branch
        %131 = sbr.rel (%p128) target = $region12
      $region11: #{tpu_custom_call.1} parent=5 // pred_region
        %s132 = ssub.s32 %s19, 1
        // Predicated region
        $region13: #{tpu_custom_call.1} parent=11 // pred_check
          %p133 = pneg %p40
        $region14: #{tpu_custom_call.1} parent=11 // pred_check_branch
          %135 = sbr.rel (%p133) target = $region16
        $region15: #{tpu_custom_call.1} parent=11 // pred_region
          _
        $region16: #{tpu_custom_call.1} parent=11 // pred_fallthru
          _
      $region12: #{tpu_custom_call.1} parent=5 // pred_fallthru
        _
      %p136 = scmp.lt.s32.totalorder %s19, 2
      // Predicated region
      $region17: #{tpu_custom_call.1} parent=5 // pred_check
        %p137 = pneg %p136
      $region18: #{tpu_custom_call.1} parent=5 // pred_check_branch
        %139 = sbr.rel (%p137) target = $region20
      $region19: #{tpu_custom_call.1} parent=5 // pred_region
        // Predicated region
        $region21: #{tpu_custom_call.1} parent=19 // pred_check
          %p140 = pneg %p60
        $region22: #{tpu_custom_call.1} parent=19 // pred_check_branch
          %142 = sbr.rel (%p140) target = $region24
        $region23: #{tpu_custom_call.1} parent=19 // pred_region
          %s143 = sand.u32 %s50, 1
          %s144 = scalar_lea.sflag [#allocation4], %s143
          %s145 = sand.u32 %s50, 1
          %s146 = smul.addr %s145, 8
          %s147 = scalar_lea.vmem [#allocation3], %s146
          %149 = vsyncadd %s144, 0
          %s150 = smul.addr %s19, 8
          %s151 = scalar_lea.hbm %s1, %s150
          %s153 = sshll.u32 %s151, 4
          %s154 = int_to_ptr.hbm [resolvable:$true] %s153
          %s155 = sshll.u32 %s147, 4
          %s156 = int_to_ptr.vmem [resolvable:$true] %s155
          %158 = dma.hbm_to_vmem [thread:$0]  %s154, 128, %s156, %s144
        $region24: #{tpu_custom_call.1} parent=19 // pred_fallthru
          _
        // Predicated region
        $region25: #{tpu_custom_call.1} parent=19 // pred_check
          %p159 = pneg %p86
        $region26: #{tpu_custom_call.1} parent=19 // pred_check_branch
          %161 = sbr.rel (%p159) target = $region28
        $region27: #{tpu_custom_call.1} parent=19 // pred_region
          %s162 = sand.u32 %s76, 1
          %s163 = scalar_lea.sflag [#allocation7], %s162
          %s164 = sand.u32 %s76, 1
          %s165 = smul.addr %s164, 8
          %s166 = scalar_lea.vmem [#allocation6], %s165
          %168 = vsyncadd %s163, 0
          %s169 = smul.addr %s19, 8
          %s170 = scalar_lea.hbm %s2, %s169
          %s172 = sshll.u32 %s170, 4
          %s173 = int_to_ptr.hbm [resolvable:$true] %s172
          %s174 = sshll.u32 %s166, 4
          %s175 = int_to_ptr.vmem [resolvable:$true] %s174
          %177 = dma.hbm_to_vmem [thread:$0]  %s173, 128, %s175, %s163
        $region28: #{tpu_custom_call.1} parent=19 // pred_fallthru
          _
      $region20: #{tpu_custom_call.1} parent=5 // pred_fallthru
        _
      %p178 = scmp.le.s32.totalorder 1, %s19
      %p179 = scmp.lt.s32.totalorder %s19, 3
      %p180 = pnand %p178, %p179
      %p181 = pneg %p180
      // Predicated region
      $region29: #{tpu_custom_call.1} parent=5 // pred_check
        _
      $region30: #{tpu_custom_call.1} parent=5 // pred_check_branch
        %183 = sbr.rel (%p180) target = $region32
      $region31: #{tpu_custom_call.1} parent=5 // pred_region
        %s184 = ssub.s32 %s19, 1
        %s185 = sand.u32 %s53, 1
        %s186 = scalar_lea.sflag [#allocation4], %s185
        %s187 = sand.u32 %s53, 1
        %s188 = smul.addr %s187, 8
        %s189 = scalar_lea.vmem [#allocation3], %s188
        // Predicated region
        $region33: #{tpu_custom_call.1} parent=31 // pred_check
          %p190 = pneg %p66
        $region34: #{tpu_custom_call.1} parent=31 // pred_check_branch
          %192 = sbr.rel (%p190) target = $region36
        $region35: #{tpu_custom_call.1} parent=31 // pred_region
          %194 = dma.done %s186, 128
        $region36: #{tpu_custom_call.1} parent=31 // pred_fallthru
          _
        %s195 = sand.u32 %s79, 1
        %s196 = scalar_lea.sflag [#allocation7], %s195
        %s197 = sand.u32 %s79, 1
        %s198 = smul.addr %s197, 8
        %s199 = scalar_lea.vmem [#allocation6], %s198
        // Predicated region
        $region37: #{tpu_custom_call.1} parent=31 // pred_check
          %p200 = pneg %p92
        $region38: #{tpu_custom_call.1} parent=31 // pred_check_branch
          %202 = sbr.rel (%p200) target = $region40
        $region39: #{tpu_custom_call.1} parent=31 // pred_region
          %204 = dma.done %s196, 128
        $region40: #{tpu_custom_call.1} parent=31 // pred_fallthru
          _
        %p205 = pneg %p40
        %p206 = pneg %p37
        %s207 = sand.u32 %s53, 1
        %s208 = scalar_lea.sflag [#allocation4], %s207
        %s209 = sand.u32 %s53, 1
        %s210 = smul.addr %s209, 8
        %s211 = scalar_lea.vmem [#allocation3], %s210
        %p212 = pneg %p66
        %p213 = pneg %p63
        %s214 = sand.u32 %s79, 1
        %s215 = scalar_lea.sflag [#allocation7], %s214
        %s216 = sand.u32 %s79, 1
        %s217 = smul.addr %s216, 8
        %s218 = scalar_lea.vmem [#allocation6], %s217
        %p219 = pneg %p92
        %p220 = pneg %p89
        %p221 = pneg %p118
        %p222 = pneg %p115
        %s223 = sand.u32 %s105, 1
        %s224 = scalar_lea.sflag [#allocation5], %s223
        %s225 = sand.u32 %s105, 1
        %s226 = smul.addr %s225, 8
        %s227 = scalar_lea.vmem [#allocation8], %s226
        %s228 = sld [smem:[#allocation2]]
        %v229 = vld [vmem:[%s189] sm:$0xff]
        %v230 = vld [vmem:[%s199] sm:$0xff]
        %v231 = vsub.f32 %v229, %v230
        %v232 = vstv %s228
        %v233 = vsub.f32 %v231, %v232
        %v234 = vmax.f32 %v233, 0.0
        %235 = vst [vmem:[%s227] sm:$0xff] %v234
        %s236 = sand.u32 %s105, 1
        %s237 = scalar_lea.sflag [#allocation5], %s236
        %s238 = sand.u32 %s105, 1
        %s239 = smul.addr %s238, 8
        %s240 = scalar_lea.vmem [#allocation8], %s239
        // Predicated region
        $region41: #{tpu_custom_call.1} parent=31 // pred_check
          %p241 = pneg %p115
        $region42: #{tpu_custom_call.1} parent=31 // pred_check_branch
          %243 = sbr.rel (%p241) target = $region44
        $region43: #{tpu_custom_call.1} parent=31 // pred_region
          %245 = vsyncadd %s237, 0
          %s246 = smul.addr %s24, 8
          %s247 = scalar_lea.hbm %s3, %s246
          %s249 = sshll.u32 %s240, 4
          %s250 = int_to_ptr.vmem [resolvable:$true] %s249
          %s251 = sshll.u32 %s247, 4
          %s252 = int_to_ptr.hbm [resolvable:$true] %s251
          %254 = dma.vmem_to_hbm [thread:$0]  %s250, 128, %s252, %s237
        $region44: #{tpu_custom_call.1} parent=31 // pred_fallthru
          _
      $region32: #{tpu_custom_call.1} parent=5 // pred_fallthru
        _
      %p255 = scmp.le.s32.totalorder 2, %s19
      // Predicated region
      $region45: #{tpu_custom_call.1} parent=5 // pred_check
        %p256 = pneg %p255
      $region46: #{tpu_custom_call.1} parent=5 // pred_check_branch
        %258 = sbr.rel (%p256) target = $region48
      $region47: #{tpu_custom_call.1} parent=5 // pred_region
        %s259 = ssub.s32 %s19, 2
        // Predicated region
        $region49: #{tpu_custom_call.1} parent=47 // pred_check
          %p260 = pneg %p121
        $region50: #{tpu_custom_call.1} parent=47 // pred_check_branch
          %262 = sbr.rel (%p260) target = $region52
        $region51: #{tpu_custom_call.1} parent=47 // pred_region
          %s263 = sand.u32 %s106, 1
          %s264 = scalar_lea.sflag [#allocation5], %s263
          %s265 = sand.u32 %s106, 1
          %s266 = smul.addr %s265, 8
          %s267 = scalar_lea.vmem [#allocation8], %s266
          %269 = dma.done %s264, 128
        $region52: #{tpu_custom_call.1} parent=47 // pred_fallthru
          _
      $region48: #{tpu_custom_call.1} parent=5 // pred_fallthru
        _
    $region6: #{tpu_custom_call.1} parent=1 // loop_footer
      %s23 = sadd.s32 1, %s19
    $region7: #{tpu_custom_call.1} parent=1 // loop_footer_branch
      %18 = sbr.rel target = $region3
    $region8: #{tpu_custom_call.1} parent=1 // loop_exit
      _
    %270 = vsyncpa [#allocation4], 1
    %s271 = scalar_lea.sflag [#allocation4], 1
    %272 = vsyncpa %s271, 1
    %273 = vsyncpa [#allocation7], 1
    %s274 = scalar_lea.sflag [#allocation7], 1
    %275 = vsyncpa %s274, 1
    %276 = vsyncpa [#allocation5], 1
    %s277 = scalar_lea.sflag [#allocation5], 1
    %278 = vsyncpa %s277, 1

</llo_original>
